<compile_context>
chip_gen: v7x
topology: tpu7x:2x2x1
jax: 0.10.0
libtpu: 0.0.40
codegen_flags: <defaults>
</compile_context>

<pallas_src>
import jax
import jax.numpy as jnp
from jax.experimental import pallas as pl
from jax.experimental.pallas import tpu as pltpu


_DMA_ALIGN_BYTES = 512          # keep every HBM segment / offset 512-B aligned
_SMALL_TOTAL_BYTES = 1 << 20    # below this XLA's native concat is already optimal


def _round_up(x, m):
    return (x + m - 1) // m * m


def _cdiv(a, b):
    return -(-a // b)


def _dma_tuning():
    """Generation-aware DMA chunking parameters.

    Returns (target_chunk_bytes, max_chunks_per_input, num_programs).
    """
    kind = ""
    try:
        kind = jax.devices()[0].device_kind.lower()
    except Exception:
        pass
    if "v5 lite" in kind or "v5e" in kind:
        # ~0.8 TB/s HBM: one stream per input is usually enough; only split
        # very large inputs.
        return 16 * 1024 * 1024, 2, 1
    if "v7" in kind:
        # 2 TensorCores and ~3.2 TB/s: many outstanding DMAs, shard the
        # issue/wait work across both cores.
        return 4 * 1024 * 1024, 8, 2
    # v6e / default (~1.35 TB/s).
    return 4 * 1024 * 1024, 8, 1


def _plan_chunks(sizes, itemsize, batch, target_chunk_bytes, max_chunks):
    """Split each input's copy into one or more DMA chunks (all static).

    For batch == 1 the destination slice is contiguous, so chunks are 1-D
    contiguous spans aligned to _DMA_ALIGN_BYTES.  For batch > 1 the copy is a
    (rows, size) strided transfer and chunks split the row dimension (segment
    size and alignment are preserved).
    """
    align_elems = max(1, _DMA_ALIGN_BYTES // itemsize)
    plans = []
    off = 0
    for s in sizes:
        nbytes = s * itemsize * batch
        n_chunks = 1
        if nbytes > target_chunk_bytes:
            n_chunks = min(max_chunks, _cdiv(nbytes, target_chunk_bytes))
        chunks = []
        if batch == 1:
            n_chunks = min(n_chunks, max(1, s // align_elems))
            step = _round_up(_cdiv(s, n_chunks), align_elems)
            start = 0
            while start < s:
                length = min(step, s - start)
                chunks.append(("flat", start, off + start, length))
                start += length
        else:
            n_chunks = min(n_chunks, batch)
            rows_per = _cdiv(batch, n_chunks)
            r = 0
            while r < batch:
                rows = min(rows_per, batch - r)
                chunks.append(("rows", r, rows, off, s))
                r += rows
        plans.append(chunks)
        off += s
    return plans


def _make_concat_dma_kernel(plans, num_inputs, num_programs):
    """Kernel that DMAs every planned chunk into its slice of the output."""
    total_chunks = sum(len(c) for c in plans)

    def kernel(*refs):
        in_refs = refs[:num_inputs]      # raw HBM refs (pl.ANY)
        out_ref = refs[num_inputs]       # raw HBM ref  (pl.ANY)
        sem = refs[num_inputs + 1]       # one DMA semaphore per chunk

        # Build one async-copy descriptor per chunk (all slices are static).
        copies = []                      # (copy, assigned_program)
        idx = 0
        for i, chunks in enumerate(plans):
            for ch in chunks:
                if ch[0] == "flat":
                    _, src_start, dst_start, length = ch
                    cp = pltpu.make_async_copy(
                        in_refs[i].at[pl.ds(src_start, length)],
                        out_ref.at[pl.ds(dst_start, length)],
                        sem.at[idx],
                    )
                else:  # "rows"
                    _, r0, rows, col_off, width = ch
                    cp = pltpu.make_async_copy(
                        in_refs[i].at[pl.ds(r0, rows), :],
                        out_ref.at[pl.ds(r0, rows), pl.ds(col_off, width)],
                        sem.at[idx],
                    )
                copies.append((cp, idx % num_programs))
                idx += 1

        if num_programs == 1:
            # Start everything first so all DMAs overlap, then wait.
            for cp, _ in copies:
                cp.start()
            for cp, _ in copies:
                cp.wait()
        else:
            # Shard issue/wait across TensorCores (v7x): each program handles
            # its assigned subset of chunks.
            pid = pl.program_id(0)
            for p in range(num_programs):
                mine = [cp for cp, a in copies if a == p]
                if not mine:
                    continue

                @pl.when(pid == p)
                def _(mine=mine):
                    for cp in mine:
                        cp.start()
                    for cp in mine:
                        cp.wait()

    return kernel, total_chunks


def concat_channels(inputs, *, force_pallas=False,
                    target_chunk_bytes=None, max_chunks_per_input=None):
    """Pallas equivalent of torch.cat(inputs, dim=1) for NCHW tensors."""
    assert len(inputs) >= 1
    B, _, H, W = inputs[0].shape
    dtype = inputs[0].dtype
    for x in inputs:
        assert x.shape[0] == B and x.shape[2] == H and x.shape[3] == W
        assert x.dtype == dtype

    c_total = sum(int(x.shape[1]) for x in inputs)
    itemsize = jnp.dtype(dtype).itemsize

    # Zero-channel inputs would produce zero-length DMAs -> drop them.
    nonempty = [x for x in inputs if int(x.shape[1]) > 0]
    if not nonempty:
        return jnp.zeros((B, 0, H, W), dtype=dtype)

    sizes = [int(x.shape[1]) * H * W for x in nonempty]
    total = sum(sizes)
    total_bytes = B * total * itemsize

    # Dispatch: unaligned segments (sub-512B / lane-unaligned destination
    # slices), tiny concats, or many tiny inputs -> XLA's native concat.
    aligned = all((s * itemsize) % _DMA_ALIGN_BYTES == 0 for s in sizes)
    small = total_bytes < _SMALL_TOTAL_BYTES
    tiny_inputs = len(nonempty) > 4 and (total_bytes // len(nonempty)) < (128 << 10)
    if (not aligned) or (not force_pallas and (small or tiny_inputs)):
        return jnp.concatenate(inputs, axis=1)

    tcb, mc, num_programs = _dma_tuning()
    if target_chunk_bytes is not None:
        tcb = int(target_chunk_bytes)
    if max_chunks_per_input is not None:
        mc = int(max_chunks_per_input)

    if B == 1:
        # Contiguous destination slices: use flat 1-D copies.
        flat = [x.reshape(-1) for x in nonempty]
        out_flat_shape = (total,)
    else:
        flat = [x.reshape(B, -1) for x in nonempty]     # (B, C_i*H*W) views
        out_flat_shape = (B, total)

    plans = _plan_chunks(sizes, itemsize, B, tcb, mc)
    kernel, total_chunks = _make_concat_dma_kernel(plans, len(flat), num_programs)

    pallas_kwargs = {}
    if num_programs > 1:
        pallas_kwargs["grid"] = (num_programs,)
        compiler_params = pltpu.CompilerParams(
            has_side_effects=True, dimension_semantics=("parallel",))
    else:
        compiler_params = pltpu.CompilerParams(has_side_effects=True)

    out_flat = pl.pallas_call(
        kernel,
        out_shape=jax.ShapeDtypeStruct(out_flat_shape, dtype),
        # Keep everything in HBM; the kernel moves data purely with DMAs.
        in_specs=[pl.BlockSpec(memory_space=pl.ANY) for _ in flat],
        out_specs=pl.BlockSpec(memory_space=pl.ANY),
        scratch_shapes=[pltpu.SemaphoreType.DMA((total_chunks,))],
        compiler_params=compiler_params,
        cost_estimate=pl.CostEstimate(
            flops=0, transcendentals=0, bytes_accessed=2 * total_bytes),
        **pallas_kwargs,
    )(*flat)

    return out_flat.reshape(B, c_total, H, W)


if __name__ == "__main__":
    key = jax.random.PRNGKey(0)
    k1, k2, k3, k4, k5 = jax.random.split(key, 5)

    # small NCHW inputs with differing channel counts
    B, H, W = 2, 16, 16
    x1 = jax.random.normal(k1, (B, 4, H, W), dtype=jnp.float32)
    x2 = jax.random.normal(k2, (B, 3, H, W), dtype=jnp.float32)
    x3 = jax.random.normal(k3, (B, 5, H, W), dtype=jnp.float32)
    x_empty = jnp.zeros((B, 0, H, W), dtype=jnp.float32)

    # 1) Pallas DMA path (one copy per input, B > 1 row-strided destinations).
    ref = jnp.concatenate([x1, x2, x3], axis=1)
    out = jax.block_until_ready(concat_channels([x1, x2, x3], force_pallas=True))
    assert out.shape == ref.shape == (B, 12, H, W)
    assert jnp.array_equal(out, ref)

    # 2) Pallas path with chunked DMAs (exercise row-chunking) + empty input.
    ref2 = jnp.concatenate([x1, x_empty, x2, x3], axis=1)
    out2 = jax.block_until_ready(
        concat_channels([x1, x_empty, x2, x3], force_pallas=True,
                        target_chunk_bytes=2048, max_chunks_per_input=4))
    assert out2.shape == ref2.shape == (B, 12, H, W)
    assert jnp.array_equal(out2, ref2)

    # 3) B == 1: contiguous flat-copy path with chunking.
    y1 = jax.random.normal(k4, (1, 8, H, W), dtype=jnp.float32)
    y2 = jax.random.normal(k5, (1, 4, H, W), dtype=jnp.float32)
    ref3 = jnp.concatenate([y1, y2], axis=1)
    out3 = jax.block_until_ready(
        concat_channels([y1, y2], force_pallas=True, target_chunk_bytes=2048))
    assert out3.shape == ref3.shape == (1, 12, H, W)
    assert jnp.array_equal(out3, ref3)

    # 4) Small-concat dispatch (falls back to XLA's native concatenate).
    out4 = jax.block_until_ready(concat_channels([x1, x2, x3]))
    assert jnp.array_equal(out4, ref)

    print("KERNEL_OK")
</pallas_src>

<mosaic_0001>
module attributes {stable_mosaic.version = 11 : i64} {
  func.func @kernel(%arg0: memref<2x1024xf32, #tpu.memory_space<any>>, %arg1: memref<2x768xf32, #tpu.memory_space<any>>, %arg2: memref<2x1280xf32, #tpu.memory_space<any>>, %arg3: memref<2x3072xf32, #tpu.memory_space<any>>, %arg4: memref<3x!tpu.dma_semaphore, #tpu.memory_space<semaphore_mem>>) attributes {dimension_semantics = [], scalar_prefetch = 0 : i64, scratch_operands = 1 : i64, tpu.core_type = #tpu.core_type<tc>} {
    %c0_i32 = arith.constant 0 : i32
    %c0_i32_0 = arith.constant 0 : i32
    %c0_i32_1 = arith.constant 0 : i32
    %0 = tpu.memref_slice %arg0[%c0_i32_0, %c0_i32_1] : memref<2x1024xf32, #tpu.memory_space<any>> -> memref<2x1024xf32, #tpu.memory_space<any>>
    %c0_i32_2 = arith.constant 0 : i32
    %c0_i32_3 = arith.constant 0 : i32
    %1 = tpu.memref_slice %arg3[%c0_i32_2, %c0_i32_3] : memref<2x3072xf32, #tpu.memory_space<any>> -> memref<2x1024xf32, #tpu.memory_space<any>>
    %2 = tpu.memref_slice %arg4[%c0_i32] : memref<3x!tpu.dma_semaphore, #tpu.memory_space<semaphore_mem>> -> memref<1x!tpu.dma_semaphore, #tpu.memory_space<semaphore_mem>>
    %3 = tpu.memref_squeeze %2 : memref<1x!tpu.dma_semaphore, #tpu.memory_space<semaphore_mem>> -> memref<!tpu.dma_semaphore, #tpu.memory_space<semaphore_mem>>
    tpu.enqueue_dma source(%0 : memref<2x1024xf32, #tpu.memory_space<any>>) target(%1 : memref<2x1024xf32, #tpu.memory_space<any>>) target_semaphore(%3 : memref<!tpu.dma_semaphore, #tpu.memory_space<semaphore_mem>>)
    %c1_i32 = arith.constant 1 : i32
    %c0_i32_4 = arith.constant 0 : i32
    %c0_i32_5 = arith.constant 0 : i32
    %4 = tpu.memref_slice %arg1[%c0_i32_4, %c0_i32_5] : memref<2x768xf32, #tpu.memory_space<any>> -> memref<2x768xf32, #tpu.memory_space<any>>
    %c0_i32_6 = arith.constant 0 : i32
    %c1024_i32 = arith.constant 1024 : i32
    %5 = tpu.memref_slice %arg3[%c0_i32_6, %c1024_i32] : memref<2x3072xf32, #tpu.memory_space<any>> -> memref<2x768xf32, #tpu.memory_space<any>>
    %6 = tpu.memref_slice %arg4[%c1_i32] : memref<3x!tpu.dma_semaphore, #tpu.memory_space<semaphore_mem>> -> memref<1x!tpu.dma_semaphore, #tpu.memory_space<semaphore_mem>>
    %7 = tpu.memref_squeeze %6 : memref<1x!tpu.dma_semaphore, #tpu.memory_space<semaphore_mem>> -> memref<!tpu.dma_semaphore, #tpu.memory_space<semaphore_mem>>
    tpu.enqueue_dma source(%4 : memref<2x768xf32, #tpu.memory_space<any>>) target(%5 : memref<2x768xf32, #tpu.memory_space<any>>) target_semaphore(%7 : memref<!tpu.dma_semaphore, #tpu.memory_space<semaphore_mem>>)
    %c2_i32 = arith.constant 2 : i32
    %c0_i32_7 = arith.constant 0 : i32
    %c0_i32_8 = arith.constant 0 : i32
    %8 = tpu.memref_slice %arg2[%c0_i32_7, %c0_i32_8] : memref<2x1280xf32, #tpu.memory_space<any>> -> memref<2x1280xf32, #tpu.memory_space<any>>
    %c0_i32_9 = arith.constant 0 : i32
    %c1792_i32 = arith.constant 1792 : i32
    %9 = tpu.memref_slice %arg3[%c0_i32_9, %c1792_i32] : memref<2x3072xf32, #tpu.memory_space<any>> -> memref<2x1280xf32, #tpu.memory_space<any>>
    %10 = tpu.memref_slice %arg4[%c2_i32] : memref<3x!tpu.dma_semaphore, #tpu.memory_space<semaphore_mem>> -> memref<1x!tpu.dma_semaphore, #tpu.memory_space<semaphore_mem>>
    %11 = tpu.memref_squeeze %10 : memref<1x!tpu.dma_semaphore, #tpu.memory_space<semaphore_mem>> -> memref<!tpu.dma_semaphore, #tpu.memory_space<semaphore_mem>>
    tpu.enqueue_dma source(%8 : memref<2x1280xf32, #tpu.memory_space<any>>) target(%9 : memref<2x1280xf32, #tpu.memory_space<any>>) target_semaphore(%11 : memref<!tpu.dma_semaphore, #tpu.memory_space<semaphore_mem>>)
    %c0_i32_10 = arith.constant 0 : i32
    %c0_i32_11 = arith.constant 0 : i32
    %c0_i32_12 = arith.constant 0 : i32
    %12 = tpu.memref_slice %arg0[%c0_i32_11, %c0_i32_12] : memref<2x1024xf32, #tpu.memory_space<any>> -> memref<2x1024xf32, #tpu.memory_space<any>>
    %c0_i32_13 = arith.constant 0 : i32
    %c0_i32_14 = arith.constant 0 : i32
    %13 = tpu.memref_slice %arg3[%c0_i32_13, %c0_i32_14] : memref<2x3072xf32, #tpu.memory_space<any>> -> memref<2x1024xf32, #tpu.memory_space<any>>
    %14 = tpu.memref_slice %arg4[%c0_i32_10] : memref<3x!tpu.dma_semaphore, #tpu.memory_space<semaphore_mem>> -> memref<1x!tpu.dma_semaphore, #tpu.memory_space<semaphore_mem>>
    %15 = tpu.memref_squeeze %14 : memref<1x!tpu.dma_semaphore, #tpu.memory_space<semaphore_mem>> -> memref<!tpu.dma_semaphore, #tpu.memory_space<semaphore_mem>>
    tpu.wait_dma2 semaphore(%15 : memref<!tpu.dma_semaphore, #tpu.memory_space<semaphore_mem>>) src(%12 : memref<2x1024xf32, #tpu.memory_space<any>>) dst(%13 : memref<2x1024xf32, #tpu.memory_space<any>>)
    %c1_i32_15 = arith.constant 1 : i32
    %c0_i32_16 = arith.constant 0 : i32
    %c0_i32_17 = arith.constant 0 : i32
    %16 = tpu.memref_slice %arg1[%c0_i32_16, %c0_i32_17] : memref<2x768xf32, #tpu.memory_space<any>> -> memref<2x768xf32, #tpu.memory_space<any>>
    %c0_i32_18 = arith.constant 0 : i32
    %c1024_i32_19 = arith.constant 1024 : i32
    %17 = tpu.memref_slice %arg3[%c0_i32_18, %c1024_i32_19] : memref<2x3072xf32, #tpu.memory_space<any>> -> memref<2x768xf32, #tpu.memory_space<any>>
    %18 = tpu.memref_slice %arg4[%c1_i32_15] : memref<3x!tpu.dma_semaphore, #tpu.memory_space<semaphore_mem>> -> memref<1x!tpu.dma_semaphore, #tpu.memory_space<semaphore_mem>>
    %19 = tpu.memref_squeeze %18 : memref<1x!tpu.dma_semaphore, #tpu.memory_space<semaphore_mem>> -> memref<!tpu.dma_semaphore, #tpu.memory_space<semaphore_mem>>
    tpu.wait_dma2 semaphore(%19 : memref<!tpu.dma_semaphore, #tpu.memory_space<semaphore_mem>>) src(%16 : memref<2x768xf32, #tpu.memory_space<any>>) dst(%17 : memref<2x768xf32, #tpu.memory_space<any>>)
    %c2_i32_20 = arith.constant 2 : i32
    %c0_i32_21 = arith.constant 0 : i32
    %c0_i32_22 = arith.constant 0 : i32
    %20 = tpu.memref_slice %arg2[%c0_i32_21, %c0_i32_22] : memref<2x1280xf32, #tpu.memory_space<any>> -> memref<2x1280xf32, #tpu.memory_space<any>>
    %c0_i32_23 = arith.constant 0 : i32
    %c1792_i32_24 = arith.constant 1792 : i32
    %21 = tpu.memref_slice %arg3[%c0_i32_23, %c1792_i32_24] : memref<2x3072xf32, #tpu.memory_space<any>> -> memref<2x1280xf32, #tpu.memory_space<any>>
    %22 = tpu.memref_slice %arg4[%c2_i32_20] : memref<3x!tpu.dma_semaphore, #tpu.memory_space<semaphore_mem>> -> memref<1x!tpu.dma_semaphore, #tpu.memory_space<semaphore_mem>>
    %23 = tpu.memref_squeeze %22 : memref<1x!tpu.dma_semaphore, #tpu.memory_space<semaphore_mem>> -> memref<!tpu.dma_semaphore, #tpu.memory_space<semaphore_mem>>
    tpu.wait_dma2 semaphore(%23 : memref<!tpu.dma_semaphore, #tpu.memory_space<semaphore_mem>>) src(%20 : memref<2x1280xf32, #tpu.memory_space<any>>) dst(%21 : memref<2x1280xf32, #tpu.memory_space<any>>)
    return
  }
}

</mosaic_0001>

<llo_original>
// kernel: tpu_custom_call.1
$region0: #{tpu_custom_call.1}
  #allocation0 [shape = 'u32[]', space=smem, size = 0x4, offset = 0x4, fixed_abs, tag = 'smem constant byte address 0x4 - core index']
  #allocation1 [shape = 'u32[144,128]{1,0:T(1,128)}', space=vmem, size = 0x12000, scoped, tag = 'internal scratch']
  #allocation2 [shape = 's32[3]{0}', space=sflag, size = 0xc, scoped, tag = 'scratch operand']
  #allocation3 [shape = 's32[]', space=sflag, size = 0x4, offset = 0, fixed_abs, tag = 'sflag constant byte address 0x0 - dummy sync flag']
  #allocation4 [shape = 'u32[0]{0}', space=smem, size = 0, offset = 0, fixed_abs, tag = 'smem constant byte address 0x0 - null']
  #allocation5 [shape = 's32[]', space=sflag, size = 0x4, offset = 0, fixed_abs, tag = 'sflag constant byte address 0x0 - dummy sync flag']
  #allocation6 [shape = 'u32[0]{0}', space=smem, size = 0, offset = 0, fixed_abs, tag = 'smem constant byte address 0x0 - null']
  #allocation7 [shape = 's32[]', space=sflag, size = 0x4, offset = 0, fixed_abs, tag = 'sflag constant byte address 0x0 - dummy sync flag']
  #allocation8 [shape = 'u32[0]{0}', space=smem, size = 0, offset = 0, fixed_abs, tag = 'smem constant byte address 0x0 - null']
  %s0 = inlined_call_operand.hbm [shape: f32[2,1024], index: 0, kind: input, shape index: {}]
  %s1 = inlined_call_operand.hbm [shape: f32[2,768], index: 1, kind: input, shape index: {}]
  %s2 = inlined_call_operand.hbm [shape: f32[2,1280], index: 2, kind: input, shape index: {}]
  %s3 = inlined_call_operand.hbm [shape: f32[2,3072], index: 3, kind: output, shape index: {}]
  %s4 = sld [smem:[#allocation0]]
  $region2: #{tpu_custom_call.1} parent=0
    _
  %s6 = ssub.s32 1, %s4
  %s7 = scalar_select 0, %s6, %s4
  %s9 = sshll.u32 1, 14
  %s10 = sxor.u32 4294967295, %s9
  %s13 = sshll.u32 3, 24
  %s14 = sxor.u32 4294967295, %s13
  %s15 = sand.u32 0, %s14
  %s17 = sor.u32 %s15, 0
  %20 = dma.general %s0, 256, %s3, [#allocation2], [#allocation3], [#allocation4], %s17, 0
  %s21 = scalar_lea.hbm %s3, 256
  %s22 = scalar_lea.sflag [#allocation2], 1
  %s24 = sshll.u32 1, 14
  %s25 = sxor.u32 4294967295, %s24
  %s28 = sshll.u32 3, 24
  %s29 = sxor.u32 4294967295, %s28
  %s30 = sand.u32 0, %s29
  %s32 = sor.u32 %s30, 0
  %35 = dma.general %s1, 192, %s21, %s22, [#allocation5], [#allocation6], %s32, 0
  %s36 = scalar_lea.hbm %s3, 448
  %s37 = scalar_lea.sflag [#allocation2], 2
  %s39 = sshll.u32 1, 14
  %s40 = sxor.u32 4294967295, %s39
  %s43 = sshll.u32 3, 24
  %s44 = sxor.u32 4294967295, %s43
  %s45 = sand.u32 0, %s44
  %s47 = sor.u32 %s45, 0
  %50 = dma.general %s2, 320, %s36, %s37, [#allocation7], [#allocation8], %s47, 0
  %s51 = smul.u32 2, 1
  %s52 = smul.u32 %s51, 8
  %s53 = sshll.u32 %s52, 4
  %54 = dma.done [#allocation2], %s53
  %s55 = smul.u32 %s51, 6
  %s56 = sshll.u32 %s55, 4
  %57 = dma.done %s22, %s56
  %s58 = smul.u32 %s51, 10
  %s59 = sshll.u32 %s58, 4
  %60 = dma.done %s37, %s59
  %61 = vsyncmov [#allocation2]
  %s62 = vpop.sfrf %61
  %p63 = scmp.eq.s32.totalorder %s62, 0
  %p64 = pneg %p63
  %66 = shalt.err (%p64)
  %s67 = scalar_lea.sflag [#allocation2], 1
  %68 = vsyncmov %s67
  %s69 = vpop.sfrf %68
  %p70 = scmp.eq.s32.totalorder %s69, 0
  %p71 = pneg %p70
  %73 = shalt.err (%p71)
  %s74 = scalar_lea.sflag [#allocation2], 2
  %75 = vsyncmov %s74
  %s76 = vpop.sfrf %75
  %p77 = scmp.eq.s32.totalorder %s76, 0
  %p78 = pneg %p77
  %80 = shalt.err (%p78)

</llo_original>
